<compile_context>
chip_gen: v7x
topology: tpu7x:2x2x1
jax: 0.10.0
libtpu: 0.0.40
codegen_flags: <defaults>
</compile_context>

<pallas_src>
import jax
import jax.numpy as jnp
from jax import lax
from jax.experimental import pallas as pl
from jax.experimental.pallas import tpu as pltpu

_EPS = 1e-5
_LEAKY_SLOPE = 0.01


# ----------------------------------------------------------------------------
# Pallas kernel: in-VMEM im2col + 3 lane-aligned MXU dots + BN shift + LeakyReLU
# ----------------------------------------------------------------------------
def _downsample_kernel(xm_ref, xe_ref, w_ref, shift_ref, o_ref):
    # xm_ref   : (1, TR, 2, Wq, 2*Cin) bf16  row-pair window for this row block
    # xe_ref   : (1, 1, 2, Wq, 2*Cin)  bf16  next row pair (dy=2 tap of last row)
    # w_ref    : (3, 4*Cin, Cout)      bf16  per-dy weights, BN scale folded,
    #                                        dx=3 block zeroed (phantom tap)
    # shift_ref: (1, Cout)             f32   folded BN shift
    # o_ref    : (1, TR, Wo, Cout)     f32
    tr = xm_ref.shape[1]
    wq = xm_ref.shape[3]
    c2 = xm_ref.shape[4]            # 2 * Cin
    wo = wq - 1
    cout = o_ref.shape[3]

    def taps(rows):
        # rows: (tr, wq, 2*Cin).  Column pairs c and c+1 give padded-input
        # columns (2c, 2c+1, 2c+2, 2c+3) -> lane-aligned (tr*wo, 4*Cin) slab.
        t = jnp.concatenate([rows[:, :wo, :], rows[:, 1:, :]], axis=-1)
        return t.reshape(tr * wo, 2 * c2)

    rows_dy0 = xm_ref[0, :, 0]                      # padded rows 2r
    rows_dy1 = xm_ref[0, :, 1]                      # padded rows 2r + 1
    next_row = xe_ref[0, :, 0]                      # padded row  2*(r0 + TR)
    if tr > 1:
        rows_dy2 = jnp.concatenate(
            [xm_ref[0, pl.ds(1, tr - 1), 0], next_row], axis=0)  # rows 2r + 2
    else:
        rows_dy2 = next_row

    acc = jnp.dot(taps(rows_dy0), w_ref[0], preferred_element_type=jnp.float32)
    acc = acc + jnp.dot(taps(rows_dy1), w_ref[1],
                        preferred_element_type=jnp.float32)
    acc = acc + jnp.dot(taps(rows_dy2), w_ref[2],
                        preferred_element_type=jnp.float32)
    acc = acc + shift_ref[...]                      # folded BN shift
    acc = jnp.where(acc >= 0.0, acc, _LEAKY_SLOPE * acc)
    o_ref[...] = acc.reshape(1, tr, wo, cout)


def _pick_row_block(ho, wq, cin, n_batch):
    """Largest divisor of Ho whose (2*TR, Wq, 2*Cin) bf16 window is <= ~2 MiB.

    Keeps the double-buffered working set inside v5e's 16 MiB default scoped
    VMEM and guarantees >= 2 grid steps (v7x megacore) when batch == 1.
    """
    budget = 2 * 1024 * 1024
    max_tr = ho if n_batch >= 2 else max(1, ho // 2)
    best = 1
    for tr in range(1, ho + 1):
        if ho % tr != 0 or tr > max_tr:
            continue
        if 2 * tr * wq * (2 * cin) * 2 <= budget:
            best = tr
    return best


def conv_bn_leakyrelu_downsample(x, w, scale, shift):
    """x: (N,H,W,Cin) NHWC; w: (3,3,Cin,Cout) HWIO -> (N,H//2,W//2,Cout) f32."""
    N, H, W, Cin = x.shape
    Cout = w.shape[-1]
    assert w.shape[:2] == (3, 3)
    assert H % 2 == 0 and W % 2 == 0, "H and W must be even"
    Ho, Wo = H // 2, W // 2
    Hq, Wq = Ho + 1, Wo + 1          # padded row-pair / column-pair counts

    # bf16 before any data movement; reflect pad == PyTorch padding_mode='reflect'.
    xb = x.astype(jnp.bfloat16)
    xp = jnp.pad(xb, ((0, 0), (1, 1), (1, 1), (0, 0)), mode="reflect")
    # Free reshape: rows grouped in pairs, column pairs folded into channels.
    xq = xp.reshape(N, Hq, 2, Wq, 2 * Cin)

    # Fold the BN scale into the weights; append a zero dx=3 tap so each dy's
    # contraction is one lane-aligned K = 4*Cin matmul.
    wf = w.astype(jnp.float32) * scale[None, None, None, :]
    wk = jnp.concatenate([wf, jnp.zeros((3, 1, Cin, Cout), wf.dtype)], axis=1)
    wk = wk.reshape(3, 4 * Cin, Cout).astype(jnp.bfloat16)
    shift2d = shift.reshape(1, Cout).astype(jnp.float32)

    TR = _pick_row_block(Ho, Wq, Cin, N)
    RB = Ho // TR
    grid = (N, RB)

    out = pl.pallas_call(
        _downsample_kernel,
        out_shape=jax.ShapeDtypeStruct((N, Ho, Wo, Cout), jnp.float32),
        grid_spec=pltpu.PrefetchScalarGridSpec(
            num_scalar_prefetch=0,
            grid=grid,
            in_specs=[
                # main row-pair window for this output-row block
                pl.BlockSpec((1, TR, 2, Wq, 2 * Cin),
                             lambda b, r: (b, r, 0, 0, 0)),
                # the single row pair just below the block (dy=2 of last row)
                pl.BlockSpec((1, 1, 2, Wq, 2 * Cin),
                             lambda b, r: (b, (r + 1) * TR, 0, 0, 0)),
                # grid-invariant weights / shift: DMA'd once
                pl.BlockSpec((3, 4 * Cin, Cout), lambda b, r: (0, 0, 0)),
                pl.BlockSpec((1, Cout), lambda b, r: (0, 0)),
            ],
            out_specs=pl.BlockSpec((1, TR, Wo, Cout),
                                   lambda b, r: (b, r, 0, 0)),
        ),
        compiler_params=pltpu.CompilerParams(
            dimension_semantics=("parallel", "parallel"),
            vmem_limit_bytes=48 * 1024 * 1024,
        ),
    )(xq, xq, wk, shift2d)
    return out


# ----------------------------------------------------------------------------
# DownSampler parameters + forward (PyTorch-facing NCHW boundary)
# ----------------------------------------------------------------------------
def init_downsampler_params(key, channels):
    k1, k2, k3, k4, k5 = jax.random.split(key, 5)
    fan_in = channels * 3 * 3
    w = jax.random.normal(k1, (3, 3, channels, channels), jnp.float32) / jnp.sqrt(
        jnp.float32(fan_in))
    gamma = jax.random.uniform(k2, (channels,), jnp.float32, 0.9, 1.1)
    beta = 0.01 * jax.random.normal(k3, (channels,), jnp.float32)
    rmean = 0.01 * jax.random.normal(k4, (channels,), jnp.float32)
    rvar = jax.random.uniform(k5, (channels,), jnp.float32, 0.9, 1.1)
    scale = gamma / jnp.sqrt(rvar + _EPS)
    shift = beta - rmean * scale
    return dict(w=w, scale=scale, shift=shift)


def downsampler_forward(params, x_nchw):
    x = jnp.transpose(x_nchw, (0, 2, 3, 1))          # NCHW -> NHWC
    y = conv_bn_leakyrelu_downsample(x, params["w"], params["scale"],
                                     params["shift"])
    return jnp.transpose(y, (0, 3, 1, 2))            # NHWC -> NCHW


def _reference_forward(params, x_nchw):
    """f32 XLA reference for a lenient numerical check of the bf16 kernel."""
    x = jnp.transpose(x_nchw, (0, 2, 3, 1)).astype(jnp.float32)
    xp = jnp.pad(x, ((0, 0), (1, 1), (1, 1), (0, 0)), mode="reflect")
    y = lax.conv_general_dilated(
        xp, params["w"], window_strides=(2, 2), padding="VALID",
        dimension_numbers=("NHWC", "HWIO", "NHWC"),
        precision=lax.Precision.HIGHEST)
    y = y * params["scale"] + params["shift"]
    y = jnp.where(y >= 0.0, y, _LEAKY_SLOPE * y)
    return jnp.transpose(y, (0, 3, 1, 2))


if __name__ == "__main__":
    key = jax.random.PRNGKey(0)
    pkey, xkey = jax.random.split(key)

    N, C, H, W = 2, 64, 16, 16
    params = init_downsampler_params(pkey, C)
    x = jax.random.normal(xkey, (N, C, H, W), jnp.float32)

    out = jax.jit(downsampler_forward)(params, x)
    out = jax.block_until_ready(out)

    assert out.shape == (N, C, H // 2, W // 2), out.shape
    assert bool(jnp.all(jnp.isfinite(out)))

    # Lenient check against an f32 XLA reference (kernel matmuls run in bf16).
    ref = _reference_forward(params, x)
    max_err = float(jnp.max(jnp.abs(out - ref)))
    assert max_err < 0.1, max_err

    print("KERNEL_OK")
</pallas_src>

<mosaic_0001>
module attributes {stable_mosaic.version = 11 : i64} {
  func.func @_downsample_kernel(%arg0: i32, %arg1: i32, %arg2: memref<1x8x2x9x128xbf16, #tpu.memory_space<vmem>>, %arg3: memref<1x1x2x9x128xbf16, #tpu.memory_space<vmem>>, %arg4: memref<3x256x64xbf16, #tpu.memory_space<vmem>>, %arg5: memref<1x64xf32, #tpu.memory_space<vmem>>, %arg6: memref<1x8x8x64xf32, #tpu.memory_space<vmem>>) attributes {dimension_semantics = [#tpu.dimension_semantics<parallel>, #tpu.dimension_semantics<parallel>], iteration_bounds = array<i64: 2, 1>, scalar_prefetch = 0 : i64, scratch_operands = 0 : i64, tpu.core_type = #tpu.core_type<tc>, window_params = [{transform_indices = @transform_0, window_bounds = array<i64: 1, 8, 2, 9, 128>}, {transform_indices = @transform_1, window_bounds = array<i64: 1, 1, 2, 9, 128>}, {pipeline_mode = #tpu.pipeline_mode<synchronous>, transform_indices = @transform_2, window_bounds = array<i64: 3, 256, 64>}, {pipeline_mode = #tpu.pipeline_mode<synchronous>, transform_indices = @transform_3, window_bounds = array<i64: 1, 64>}, {transform_indices = @transform_4, window_bounds = array<i64: 1, 8, 8, 64>}]} {
    %c0 = arith.constant 0 : index
    %c0_0 = arith.constant 0 : index
    %c0_1 = arith.constant 0 : index
    %c0_2 = arith.constant 0 : index
    %c0_3 = arith.constant 0 : index
    %0 = vector.load %arg2[%c0, %c0_0, %c0_1, %c0_2, %c0_3] : memref<1x8x2x9x128xbf16, #tpu.memory_space<vmem>>, vector<1x8x1x9x128xbf16>
    %1 = vector.shape_cast %0 : vector<1x8x1x9x128xbf16> to vector<8x9x128xbf16>
    %c0_4 = arith.constant 0 : index
    %c0_5 = arith.constant 0 : index
    %c1 = arith.constant 1 : index
    %c0_6 = arith.constant 0 : index
    %c0_7 = arith.constant 0 : index
    %2 = vector.load %arg2[%c0_4, %c0_5, %c1, %c0_6, %c0_7] : memref<1x8x2x9x128xbf16, #tpu.memory_space<vmem>>, vector<1x8x1x9x128xbf16>
    %3 = vector.shape_cast %2 : vector<1x8x1x9x128xbf16> to vector<8x9x128xbf16>
    %c0_8 = arith.constant 0 : index
    %c0_9 = arith.constant 0 : index
    %c0_10 = arith.constant 0 : index
    %c0_11 = arith.constant 0 : index
    %c0_12 = arith.constant 0 : index
    %4 = vector.load %arg3[%c0_8, %c0_9, %c0_10, %c0_11, %c0_12] : memref<1x1x2x9x128xbf16, #tpu.memory_space<vmem>>, vector<1x1x1x9x128xbf16>
    %5 = vector.shape_cast %4 : vector<1x1x1x9x128xbf16> to vector<1x9x128xbf16>
    %c0_13 = arith.constant 0 : index
    %c1_14 = arith.constant 1 : index
    %c0_15 = arith.constant 0 : index
    %c0_16 = arith.constant 0 : index
    %c0_17 = arith.constant 0 : index
    %6 = vector.load %arg2[%c0_13, %c1_14, %c0_15, %c0_16, %c0_17] : memref<1x8x2x9x128xbf16, #tpu.memory_space<vmem>>, vector<1x7x1x9x128xbf16>
    %7 = vector.shape_cast %6 : vector<1x7x1x9x128xbf16> to vector<7x9x128xbf16>
    %8 = tpu.concatenate %7, %5 in 0 : vector<7x9x128xbf16>, vector<1x9x128xbf16> -> vector<8x9x128xbf16>
    %9 = vector.extract_strided_slice %1 {offsets = [0, 0, 0], sizes = [8, 8, 128], strides = [1, 1, 1]} : vector<8x9x128xbf16> to vector<8x8x128xbf16>
    %10 = vector.extract_strided_slice %1 {offsets = [0, 1, 0], sizes = [8, 8, 128], strides = [1, 1, 1]} : vector<8x9x128xbf16> to vector<8x8x128xbf16>
    %11 = tpu.concatenate %9, %10 in 2 : vector<8x8x128xbf16>, vector<8x8x128xbf16> -> vector<8x8x256xbf16>
    %12 = vector.shape_cast %11 : vector<8x8x256xbf16> to vector<64x256xbf16>
    %c0_18 = arith.constant 0 : index
    %c0_19 = arith.constant 0 : index
    %c0_20 = arith.constant 0 : index
    %13 = vector.load %arg4[%c0_18, %c0_19, %c0_20] : memref<3x256x64xbf16, #tpu.memory_space<vmem>>, vector<1x256x64xbf16>
    %14 = vector.shape_cast %13 : vector<1x256x64xbf16> to vector<256x64xbf16>
    %cst = arith.constant dense<0.000000e+00> : vector<64x64xf32>
    %15 = tpu.matmul %12, %14, %cst {dimension_numbers = #tpu.dot_dimension_numbers<[1], [0], [0], [1], [0, 0, 1, 1], [], []>} : vector<64x256xbf16>, vector<256x64xbf16>, vector<64x64xf32> -> vector<64x64xf32>
    %16 = vector.extract_strided_slice %3 {offsets = [0, 0, 0], sizes = [8, 8, 128], strides = [1, 1, 1]} : vector<8x9x128xbf16> to vector<8x8x128xbf16>
    %17 = vector.extract_strided_slice %3 {offsets = [0, 1, 0], sizes = [8, 8, 128], strides = [1, 1, 1]} : vector<8x9x128xbf16> to vector<8x8x128xbf16>
    %18 = tpu.concatenate %16, %17 in 2 : vector<8x8x128xbf16>, vector<8x8x128xbf16> -> vector<8x8x256xbf16>
    %19 = vector.shape_cast %18 : vector<8x8x256xbf16> to vector<64x256xbf16>
    %c1_21 = arith.constant 1 : index
    %c0_22 = arith.constant 0 : index
    %c0_23 = arith.constant 0 : index
    %20 = vector.load %arg4[%c1_21, %c0_22, %c0_23] : memref<3x256x64xbf16, #tpu.memory_space<vmem>>, vector<1x256x64xbf16>
    %21 = vector.shape_cast %20 : vector<1x256x64xbf16> to vector<256x64xbf16>
    %cst_24 = arith.constant dense<0.000000e+00> : vector<64x64xf32>
    %22 = tpu.matmul %19, %21, %cst_24 {dimension_numbers = #tpu.dot_dimension_numbers<[1], [0], [0], [1], [0, 0, 1, 1], [], []>} : vector<64x256xbf16>, vector<256x64xbf16>, vector<64x64xf32> -> vector<64x64xf32>
    %23 = arith.addf %15, %22 : vector<64x64xf32>
    %24 = vector.extract_strided_slice %8 {offsets = [0, 0, 0], sizes = [8, 8, 128], strides = [1, 1, 1]} : vector<8x9x128xbf16> to vector<8x8x128xbf16>
    %25 = vector.extract_strided_slice %8 {offsets = [0, 1, 0], sizes = [8, 8, 128], strides = [1, 1, 1]} : vector<8x9x128xbf16> to vector<8x8x128xbf16>
    %26 = tpu.concatenate %24, %25 in 2 : vector<8x8x128xbf16>, vector<8x8x128xbf16> -> vector<8x8x256xbf16>
    %27 = vector.shape_cast %26 : vector<8x8x256xbf16> to vector<64x256xbf16>
    %c2 = arith.constant 2 : index
    %c0_25 = arith.constant 0 : index
    %c0_26 = arith.constant 0 : index
    %28 = vector.load %arg4[%c2, %c0_25, %c0_26] : memref<3x256x64xbf16, #tpu.memory_space<vmem>>, vector<1x256x64xbf16>
    %29 = vector.shape_cast %28 : vector<1x256x64xbf16> to vector<256x64xbf16>
    %cst_27 = arith.constant dense<0.000000e+00> : vector<64x64xf32>
    %30 = tpu.matmul %27, %29, %cst_27 {dimension_numbers = #tpu.dot_dimension_numbers<[1], [0], [0], [1], [0, 0, 1, 1], [], []>} : vector<64x256xbf16>, vector<256x64xbf16>, vector<64x64xf32> -> vector<64x64xf32>
    %31 = arith.addf %23, %30 : vector<64x64xf32>
    %c0_28 = arith.constant 0 : index
    %c0_29 = arith.constant 0 : index
    %32 = vector.load %arg5[%c0_28, %c0_29] : memref<1x64xf32, #tpu.memory_space<vmem>>, vector<1x64xf32>
    %33 = vector.broadcast %32 : vector<1x64xf32> to vector<64x64xf32>
    %34 = arith.addf %31, %33 : vector<64x64xf32>
    %cst_30 = arith.constant 0.000000e+00 : f32
    %35 = vector.broadcast %cst_30 : f32 to vector<64x64xf32>
    %36 = arith.cmpf oge, %34, %35 : vector<64x64xf32>
    %cst_31 = arith.constant 0.00999999977 : f32
    %37 = vector.broadcast %cst_31 : f32 to vector<64x64xf32>
    %38 = arith.mulf %37, %34 : vector<64x64xf32>
    %39 = arith.select %36, %34, %38 : vector<64x64xi1>, vector<64x64xf32>
    %40 = vector.shape_cast %39 : vector<64x64xf32> to vector<1x8x8x64xf32>
    %c0_32 = arith.constant 0 : index
    %c0_33 = arith.constant 0 : index
    %c0_34 = arith.constant 0 : index
    %c0_35 = arith.constant 0 : index
    %41 = vector.load %arg6[%c0_32, %c0_33, %c0_34, %c0_35] : memref<1x8x8x64xf32, #tpu.memory_space<vmem>>, vector<1x8x8x64xf32>
    tpu.vector_store %arg6[%c0_32, %c0_33, %c0_34, %c0_35], %40 {strides = array<i32>} : memref<1x8x8x64xf32, #tpu.memory_space<vmem>>, vector<1x8x8x64xf32>,
    return
  }
  func.func @transform_0(%arg0: i32, %arg1: i32) -> (i32, i32, i32, i32, i32) {
    %c0_i32 = arith.constant 0 : i32
    %c0_i32_0 = arith.constant 0 : i32
    %c0_i32_1 = arith.constant 0 : i32
    %c0_i32_2 = arith.constant 0 : i32
    return %arg0, %arg1, %c0_i32, %c0_i32_0, %c0_i32_1 : i32, i32, i32, i32, i32
  }
  func.func @transform_1(%arg0: i32, %arg1: i32) -> (i32, i32, i32, i32, i32) {
    %c1_i32 = arith.constant 1 : i32
    %0 = arith.addi %arg1, %c1_i32 : i32
    %c8_i32 = arith.constant 8 : i32
    %1 = arith.muli %0, %c8_i32 : i32
    %c0_i32 = arith.constant 0 : i32
    %c0_i32_0 = arith.constant 0 : i32
    %c0_i32_1 = arith.constant 0 : i32
    %c0_i32_2 = arith.constant 0 : i32
    return %arg0, %1, %c0_i32, %c0_i32_0, %c0_i32_1 : i32, i32, i32, i32, i32
  }
  func.func @transform_2(%arg0: i32, %arg1: i32) -> (i32, i32, i32) {
    %c0_i32 = arith.constant 0 : i32
    %c0_i32_0 = arith.constant 0 : i32
    %c0_i32_1 = arith.constant 0 : i32
    %c0_i32_2 = arith.constant 0 : i32
    return %c0_i32, %c0_i32_0, %c0_i32_1 : i32, i32, i32
  }
  func.func @transform_3(%arg0: i32, %arg1: i32) -> (i32, i32) {
    %c0_i32 = arith.constant 0 : i32
    %c0_i32_0 = arith.constant 0 : i32
    %c0_i32_1 = arith.constant 0 : i32
    return %c0_i32, %c0_i32_0 : i32, i32
  }
  func.func @transform_4(%arg0: i32, %arg1: i32) -> (i32, i32, i32, i32) {
    %c0_i32 = arith.constant 0 : i32
    %c0_i32_0 = arith.constant 0 : i32
    %c0_i32_1 = arith.constant 0 : i32
    return %arg0, %arg1, %c0_i32, %c0_i32_0 : i32, i32, i32, i32
  }
}

</mosaic_0001>

<llo_original>
// kernel: downsampler_forward.1
$region0: #{downsampler_forward.1}
  #allocation0 [shape = 'u32[]', space=smem, size = 0x4, offset = 0x4, fixed_abs, tag = 'smem constant byte address 0x4 - core index']
  #allocation1 [shape = 'u32[144,128]{1,0:T(1,128)}', space=vmem, size = 0x12000, scoped, tag = 'internal scratch']
  %s0 = inlined_call_operand.vmem [shape: bf16[2,9,2,9,128], index: 0, kind: input, shape index: {}, may-alias: {0,1}]
  %s1 = inlined_call_operand.vmem [shape: bf16[2,9,2,9,128], index: 1, kind: input, shape index: {}, may-alias: {0,1}]
  %s2 = inlined_call_operand.vmem [shape: bf16[3,256,64], index: 2, kind: input, shape index: {}]
  %s3 = inlined_call_operand.vmem [shape: f32[1,64], index: 3, kind: input, shape index: {}]
  %s4 = inlined_call_operand.hbm [shape: f32[2,8,8,64], index: 4, kind: output, shape index: {}]
  %s5 = sld [smem:[#allocation0]]
  $region49: #{downsampler_forward.1} parent=0
    _
  %s7 = ssub.s32 1, %s5
  %s8 = scalar_select 0, %s7, %s5
  $region1: #{downsampler_forward.1} parent=0
    #allocation2 [shape = 'u8[65536]{0}', space=vmem, size = 0x10000, scoped, tag = 'output window, operand 0']
    #allocation3 [shape = 's32[2]{0}', space=sflag, size = 0x8, scoped, tag = 'scoped memory for downsampler_forward.1']
    %9 = vsyncpa [#allocation3], 0
    %s10 = scalar_lea.sflag [#allocation3], 1
    %11 = vsyncpa %s10, 0
    loop: start=0, step=1, limit=4
    $region2: #{downsampler_forward.1} parent=1 // loop_pre_header
      _
    $region3: #{downsampler_forward.1} parent=1 // loop_header
      %s13 = sphi 0, %s17
      %p14 = scmp.ge.s32.totalorder %s13, 4
      %s20 = sphi 0, %s32
      %s21 = sphi 0, %s28
      %s22 = sphi 0, %s20
      %s23 = sphi 0, %s21
      %s24 = sphi 0, %s22
      %s25 = sphi 0, %s23
      %s37 = sphi 0, %s39
      %s40 = sphi 0, %s37
      %s41 = sphi 0, %s40
      %s57 = sphi 0, %s41
      %s69 = sphi 0, %s71
      %s72 = sphi 0, %s69
      %s73 = sphi 0, %s72
      %s89 = sphi 0, %s73
      %s93 = sphi 0, %s93
      %s95 = sphi 0, %s93
      %s96 = sphi 0, %s95
      %s110 = sphi 0, %s96
      %s114 = sphi 0, %s114
      %s116 = sphi 0, %s114
      %s117 = sphi 0, %s116
      %s131 = sphi 0, %s117
      %s139 = sphi 0, %s141
      %s142 = sphi 0, %s139
      %s143 = sphi 0, %s142
      %s159 = sphi 0, %s143
    $region4: #{downsampler_forward.1} parent=1 // loop_header_branch
      %16 = sbr.rel (%p14) target = $region8
    $region5: #{downsampler_forward.1} parent=1 // loop_body
      %s18 = ssub.s32 %s13, 1
      %s19 = ssub.s32 %s13, 2
      %s26 = sadd.s32 1, %s21
      %p27 = scmp.ge.s32.totalorder %s26, 1
      %s28 = scalar_select %p27, 0, %s26
      %s29 = sadd.s32 1, %s20
      %s30 = scalar_select %p27, %s29, %s20
      %p31 = scmp.ge.s32.totalorder %s30, 2
      %s32 = scalar_select %p31, 0, %s30
      %s33 = ssub.s32 %s20, %s32
      %s34 = ssub.s32 %s21, %s28
      %s35 = sor.u32 %s33, %s34
      %p36 = scmp.eq.s32.totalorder %s35, 0
      %s38 = sadd.s32 %s37, 1
      %s39 = scalar_select %p36, %s37, %s38
      %p42 = pneg %p36
      %p43 = scmp.eq.s32.totalorder %s13, 1
      %p44 = por %p42, %p43
      %p45 = scmp.ne.s32.totalorder %s37, %s40
      %p46 = scmp.eq.s32.totalorder %s13, 0
      %p47 = por %p45, %p46
      %p48 = scmp.ne.s32.totalorder %s37, %s40
      %p49 = scmp.eq.s32.totalorder %s18, 1
      %p50 = por %p48, %p49
      %p51 = scmp.ne.s32.totalorder %s40, %s41
      %p52 = scmp.eq.s32.totalorder %s18, 0
      %p53 = por %p51, %p52
      %p54 = scmp.ne.s32.totalorder %s40, %s41
      %p55 = scmp.eq.s32.totalorder %s19, 1
      %p56 = por %p54, %p55
      %p58 = scmp.ne.s32.totalorder %s41, %s57
      %p59 = scmp.eq.s32.totalorder %s19, 0
      %p60 = por %p58, %p59
      %s61 = sadd.s32 %s21, 1
      %s62 = smul.u32 %s61, 8
      %s63 = sadd.s32 %s28, 1
      %s64 = smul.u32 %s63, 8
      %s65 = ssub.s32 %s20, %s32
      %s66 = ssub.s32 %s62, %s64
      %s67 = sor.u32 %s65, %s66
      %p68 = scmp.eq.s32.totalorder %s67, 0
      %s70 = sadd.s32 %s69, 1
      %s71 = scalar_select %p68, %s69, %s70
      %p74 = pneg %p68
      %p75 = scmp.eq.s32.totalorder %s13, 1
      %p76 = por %p74, %p75
      %p77 = scmp.ne.s32.totalorder %s69, %s72
      %p78 = scmp.eq.s32.totalorder %s13, 0
      %p79 = por %p77, %p78
      %p80 = scmp.ne.s32.totalorder %s69, %s72
      %p81 = scmp.eq.s32.totalorder %s18, 1
      %p82 = por %p80, %p81
      %p83 = scmp.ne.s32.totalorder %s72, %s73
      %p84 = scmp.eq.s32.totalorder %s18, 0
      %p85 = por %p83, %p84
      %p86 = scmp.ne.s32.totalorder %s72, %s73
      %p87 = scmp.eq.s32.totalorder %s19, 1
      %p88 = por %p86, %p87
      %p90 = scmp.ne.s32.totalorder %s73, %s89
      %p91 = scmp.eq.s32.totalorder %s19, 0
      %p92 = por %p90, %p91
      %s94 = sadd.s32 %s93, 1
      %p97 = scmp.eq.s32.totalorder %s13, 1
      %p98 = scmp.ne.s32.totalorder %s93, %s95
      %p99 = scmp.eq.s32.totalorder %s13, 0
      %p100 = por %p98, %p99
      %p101 = scmp.ne.s32.totalorder %s93, %s95
      %p102 = scmp.eq.s32.totalorder %s18, 1
      %p103 = por %p101, %p102
      %p104 = scmp.ne.s32.totalorder %s95, %s96
      %p105 = scmp.eq.s32.totalorder %s18, 0
      %p106 = por %p104, %p105
      %p107 = scmp.ne.s32.totalorder %s95, %s96
      %p108 = scmp.eq.s32.totalorder %s19, 1
      %p109 = por %p107, %p108
      %p111 = scmp.ne.s32.totalorder %s96, %s110
      %p112 = scmp.eq.s32.totalorder %s19, 0
      %p113 = por %p111, %p112
      %s115 = sadd.s32 %s114, 1
      %p118 = scmp.eq.s32.totalorder %s13, 1
      %p119 = scmp.ne.s32.totalorder %s114, %s116
      %p120 = scmp.eq.s32.totalorder %s13, 0
      %p121 = por %p119, %p120
      %p122 = scmp.ne.s32.totalorder %s114, %s116
      %p123 = scmp.eq.s32.totalorder %s18, 1
      %p124 = por %p122, %p123
      %p125 = scmp.ne.s32.totalorder %s116, %s117
      %p126 = scmp.eq.s32.totalorder %s18, 0
      %p127 = por %p125, %p126
      %p128 = scmp.ne.s32.totalorder %s116, %s117
      %p129 = scmp.eq.s32.totalorder %s19, 1
      %p130 = por %p128, %p129
      %p132 = scmp.ne.s32.totalorder %s117, %s131
      %p133 = scmp.eq.s32.totalorder %s19, 0
      %p134 = por %p132, %p133
      %s135 = ssub.s32 %s20, %s32
      %s136 = ssub.s32 %s21, %s28
      %s137 = sor.u32 %s135, %s136
      %p138 = scmp.eq.s32.totalorder %s137, 0
      %s140 = sadd.s32 %s139, 1
      %s141 = scalar_select %p138, %s139, %s140
      %p144 = pneg %p138
      %p145 = scmp.eq.s32.totalorder %s13, 1
      %p146 = por %p144, %p145
      %p147 = scmp.ne.s32.totalorder %s139, %s142
      %p148 = scmp.eq.s32.totalorder %s13, 0
      %p149 = por %p147, %p148
      %p150 = scmp.ne.s32.totalorder %s139, %s142
      %p151 = scmp.eq.s32.totalorder %s18, 1
      %p152 = por %p150, %p151
      %p153 = scmp.ne.s32.totalorder %s142, %s143
      %p154 = scmp.eq.s32.totalorder %s18, 0
      %p155 = por %p153, %p154
      %p156 = scmp.ne.s32.totalorder %s142, %s143
      %p157 = scmp.eq.s32.totalorder %s19, 1
      %p158 = por %p156, %p157
      %p160 = scmp.ne.s32.totalorder %s143, %s159
      %p161 = scmp.eq.s32.totalorder %s19, 0
      %p162 = por %p160, %p161
      %p163 = scmp.le.s32.totalorder 1, %s13
      %p164 = scmp.lt.s32.totalorder %s13, 3
      %p165 = pnand %p163, %p164
      %p166 = pneg %p165
      // Predicated region
      $region9: #{downsampler_forward.1} parent=5 // pred_check
        _
      $region10: #{downsampler_forward.1} parent=5 // pred_check_branch
        %168 = sbr.rel (%p165) target = $region12
      $region11: #{downsampler_forward.1} parent=5 // pred_region
        %s169 = ssub.s32 %s13, 1
        // Predicated region
        $region13: #{downsampler_forward.1} parent=11 // pred_check
          %p170 = pneg %p106
        $region14: #{downsampler_forward.1} parent=11 // pred_check_branch
          %172 = sbr.rel (%p170) target = $region16
        $region15: #{downsampler_forward.1} parent=11 // pred_region
          _
        $region16: #{downsampler_forward.1} parent=11 // pred_fallthru
          _
        // Predicated region
        $region17: #{downsampler_forward.1} parent=11 // pred_check
          %p173 = pneg %p127
        $region18: #{downsampler_forward.1} parent=11 // pred_check_branch
          %175 = sbr.rel (%p173) target = $region20
        $region19: #{downsampler_forward.1} parent=11 // pred_region
          _
        $region20: #{downsampler_forward.1} parent=11 // pred_fallthru
          _
      $region12: #{downsampler_forward.1} parent=5 // pred_fallthru
        _
      %p176 = scmp.lt.s32.totalorder %s13, 2
      // Predicated region
      $region21: #{downsampler_forward.1} parent=5 // pred_check
        %p177 = pneg %p176
      $region22: #{downsampler_forward.1} parent=5 // pred_check_branch
        %179 = sbr.rel (%p177) target = $region24
      $region23: #{downsampler_forward.1} parent=5 // pred_region
        // Predicated region
        $region25: #{downsampler_forward.1} parent=23 // pred_check
          %p180 = pneg %p47
        $region26: #{downsampler_forward.1} parent=23 // pred_check_branch
          %182 = sbr.rel (%p180) target = $region28
        $region27: #{downsampler_forward.1} parent=23 // pred_region
          %s183 = smul.u32 8, %s21
          %s184 = ssub.s32 9, %s183
          %p185 = scmp.lt.s32.totalorder %s184, 8
          %s186 = scalar_select %p185, %s184, 8
          %s187 = smul.u32 64, %s186
          %s188 = smul.u32 %s187, 2
          %s189 = smul.u32 %s188, 2
          %p190 = scmp.lt.s32.totalorder %s20, 1
          %s191 = scalar_select %p190, %s20, 1
          %p192 = scmp.lt.s32.totalorder %s183, 8
          %s193 = scalar_select %p192, %s183, 8
          %s194 = smul.addr %s193, 4
          %s195 = smul.addr %s191, 36
          %s196 = sadd.s32 %s194, %s195
          %s197 = smul.addr %s196, 4
          %s198 = scalar_lea.vmem %s0, %s197
          %s199 = smul.u32 8, %s21
          %s200 = ssub.s32 9, %s199
          %p201 = scmp.lt.s32.totalorder %s200, 8
          %s202 = scalar_select %p201, %s200, 8
          %s203 = smul.u32 64, %s202
          %s204 = smul.u32 %s203, 2
          %s205 = smul.u32 %s204, 2
        $region28: #{downsampler_forward.1} parent=23 // pred_fallthru
          _
        // Predicated region
        $region29: #{downsampler_forward.1} parent=23 // pred_check
          %p206 = pneg %p79
        $region30: #{downsampler_forward.1} parent=23 // pred_check_branch
          %208 = sbr.rel (%p206) target = $region32
        $region31: #{downsampler_forward.1} parent=23 // pred_region
          %s209 = sadd.s32 %s21, 1
          %s210 = smul.u32 %s209, 8
          %p211 = scmp.lt.s32.totalorder %s20, 1
          %s212 = scalar_select %p211, %s20, 1
          %p213 = scmp.lt.s32.totalorder %s210, 8
          %s214 = scalar_select %p213, %s210, 8
          %s215 = smul.addr %s214, 4
          %s216 = smul.addr %s212, 36
          %s217 = sadd.s32 %s215, %s216
          %s218 = smul.addr %s217, 4
          %s219 = scalar_lea.vmem %s1, %s218
          %s220 = sadd.s32 %s21, 1
          %s221 = smul.u32 %s220, 8
        $region32: #{downsampler_forward.1} parent=23 // pred_fallthru
          _
      $region24: #{downsampler_forward.1} parent=5 // pred_fallthru
        _
      %p222 = scmp.le.s32.totalorder 1, %s13
      %p223 = scmp.lt.s32.totalorder %s13, 3
      %p224 = pnand %p222, %p223
      %p225 = pneg %p224
      // Predicated region
      $region33: #{downsampler_forward.1} parent=5 // pred_check
        _
      $region34: #{downsampler_forward.1} parent=5 // pred_check_branch
        %227 = sbr.rel (%p224) target = $region36
      $region35: #{downsampler_forward.1} parent=5 // pred_region
        %s228 = ssub.s32 %s13, 1
        %s229 = smul.u32 8, %s23
        %s230 = ssub.s32 9, %s229
        %p231 = scmp.lt.s32.totalorder %s230, 8
        %s232 = scalar_select %p231, %s230, 8
        %s233 = smul.u32 64, %s232
        %s234 = smul.u32 %s233, 2
        %s235 = smul.u32 %s234, 2
        %p236 = scmp.lt.s32.totalorder %s22, 1
        %s237 = scalar_select %p236, %s22, 1
        %p238 = scmp.lt.s32.totalorder %s229, 8
        %s239 = scalar_select %p238, %s229, 8
        %s240 = smul.addr %s239, 4
        %s241 = smul.addr %s237, 36
        %s242 = sadd.s32 %s240, %s241
        %s243 = smul.addr %s242, 4
        %s244 = scalar_lea.vmem %s0, %s243
        %p245 = pneg %p53
        %p246 = pneg %p50
        %s247 = sadd.s32 %s23, 1
        %s248 = smul.u32 %s247, 8
        %p249 = scmp.lt.s32.totalorder %s22, 1
        %s250 = scalar_select %p249, %s22, 1
        %p251 = scmp.lt.s32.totalorder %s248, 8
        %s252 = scalar_select %p251, %s248, 8
        %s253 = smul.addr %s252, 4
        %s254 = smul.addr %s250, 36
        %s255 = sadd.s32 %s253, %s254
        %s256 = smul.addr %s255, 4
        %s257 = scalar_lea.vmem %s1, %s256
        %p258 = pneg %p85
        %p259 = pneg %p82
        %p260 = pneg %p106
        %p261 = pneg %p103
        %p262 = pneg %p127
        %p263 = pneg %p124
        %p264 = pneg %p155
        %p265 = pneg %p152
        %s266 = sand.u32 %s142, 1
        %s267 = scalar_lea.sflag [#allocation3], %s266
        %s268 = sand.u32 %s142, 1
        %s269 = smul.addr %s268, 64
        %s270 = scalar_lea.vmem [#allocation2], %s269
        %s271 = smul.u32 8, %s23
        %s272 = ssub.s32 9, %s271
        %p273 = scmp.lt.s32.totalorder %s272, 8
        %s274 = scalar_select %p273, %s272, 8
        %s275 = smul.u32 64, %s274
        %s276 = smul.u32 %s275, 2
        %s277 = smul.u32 %s276, 2
        %p278 = scmp.lt.s32.totalorder %s22, 1
        %s279 = scalar_select %p278, %s22, 1
        %p280 = scmp.lt.s32.totalorder %s271, 8
        %s281 = scalar_select %p280, %s271, 8
        %s282 = smul.addr %s281, 4
        %s283 = smul.addr %s279, 36
        %s284 = sadd.s32 %s282, %s283
        %s285 = smul.addr %s284, 4
        %s286 = scalar_lea.vmem %s0, %s285
        %s287 = smul.u32 8, %s23
        %s288 = ssub.s32 9, %s287
        %p289 = scmp.lt.s32.totalorder %s288, 8
        %s290 = scalar_select %p289, %s288, 8
        %s291 = smul.u32 64, %s290
        %s292 = smul.u32 %s291, 2
        %s293 = smul.u32 %s292, 2
        %s294 = sadd.s32 %s23, 1
        %s295 = smul.u32 %s294, 8
        %p296 = scmp.lt.s32.totalorder %s22, 1
        %s297 = scalar_select %p296, %s22, 1
        %p298 = scmp.lt.s32.totalorder %s295, 8
        %s299 = scalar_select %p298, %s295, 8
        %s300 = smul.addr %s299, 4
        %s301 = smul.addr %s297, 36
        %s302 = sadd.s32 %s300, %s301
        %s303 = smul.addr %s302, 4
        %s304 = scalar_lea.vmem %s1, %s303
        %s305 = sadd.s32 %s23, 1
        %s306 = smul.u32 %s305, 8
        %s307 = smul.u32 8, %s23
        %v309 = vld [vmem:[%s286] sm:$0xf]
        %v310 = vld [vmem:[%s286 + $0x4] sm:$0x1]
        %v311 = vld [vmem:[%s286 + $0x10] sm:$0xf]
        %v312 = vld [vmem:[%s286 + $0x14] sm:$0x1]
        %v313 = vld [vmem:[%s286 + $0x20] sm:$0xf]
        %v314 = vld [vmem:[%s286 + $0x24] sm:$0x1]
        %v315 = vld [vmem:[%s286 + $0x30] sm:$0xf]
        %v316 = vld [vmem:[%s286 + $0x34] sm:$0x1]
        %v317 = vld [vmem:[%s286 + $0x40] sm:$0xf]
        %v318 = vld [vmem:[%s286 + $0x44] sm:$0x1]
        %v319 = vld [vmem:[%s286 + $0x50] sm:$0xf]
        %v320 = vld [vmem:[%s286 + $0x54] sm:$0x1]
        %v321 = vld [vmem:[%s286 + $0x60] sm:$0xf]
        %v322 = vld [vmem:[%s286 + $0x64] sm:$0x1]
        %v323 = vld [vmem:[%s286 + $0x70] sm:$0xf]
        %v324 = vld [vmem:[%s286 + $0x74] sm:$0x1]
        %s325 = scalar_lea.vmem %s286, 8
        %v326 = vld [vmem:[%s325] sm:$0xf]
        %v327 = vld [vmem:[%s325 + $0x4] sm:$0x1]
        %v328 = vld [vmem:[%s325 + $0x10] sm:$0xf]
        %v329 = vld [vmem:[%s325 + $0x14] sm:$0x1]
        %v330 = vld [vmem:[%s325 + $0x20] sm:$0xf]
        %v331 = vld [vmem:[%s325 + $0x24] sm:$0x1]
        %v332 = vld [vmem:[%s325 + $0x30] sm:$0xf]
        %v333 = vld [vmem:[%s325 + $0x34] sm:$0x1]
        %v334 = vld [vmem:[%s325 + $0x40] sm:$0xf]
        %v335 = vld [vmem:[%s325 + $0x44] sm:$0x1]
        %v336 = vld [vmem:[%s325 + $0x50] sm:$0xf]
        %v337 = vld [vmem:[%s325 + $0x54] sm:$0x1]
        %v338 = vld [vmem:[%s325 + $0x60] sm:$0xf]
        %v339 = vld [vmem:[%s325 + $0x64] sm:$0x1]
        %v340 = vld [vmem:[%s325 + $0x70] sm:$0xf]
        %v341 = vld [vmem:[%s325 + $0x74] sm:$0x1]
        %v342 = vld [vmem:[%s304] sm:$0xf]
        %v343 = vld [vmem:[%s304 + $0x4] sm:$0x1]
        %s344 = scalar_lea.vmem %s286, 16
        %v345 = vld [vmem:[%s344] sm:$0xf]
        %v346 = vld [vmem:[%s344 + $0x4] sm:$0x1]
        %v347 = vld [vmem:[%s344 + $0x10] sm:$0xf]
        %v348 = vld [vmem:[%s344 + $0x14] sm:$0x1]
        %v349 = vld [vmem:[%s344 + $0x20] sm:$0xf]
        %v350 = vld [vmem:[%s344 + $0x24] sm:$0x1]
        %v351 = vld [vmem:[%s344 + $0x30] sm:$0xf]
        %v352 = vld [vmem:[%s344 + $0x34] sm:$0x1]
        %v353 = vld [vmem:[%s344 + $0x40] sm:$0xf]
        %v354 = vld [vmem:[%s344 + $0x44] sm:$0x1]
        %v355 = vld [vmem:[%s344 + $0x50] sm:$0xf]
        %v356 = vld [vmem:[%s344 + $0x54] sm:$0x1]
        %v357 = vld [vmem:[%s344 + $0x60] sm:$0xf]
        %v358 = vld [vmem:[%s344 + $0x64] sm:$0x1]
        %v375 = vunpack.c.l.b16 %v309
        %v376 = vunpack.c.l.b16 %v310
        %v377 = vunpack.c.l.b16 %v311
        %v378 = vunpack.c.l.b16 %v312
        %v379 = vunpack.c.l.b16 %v313
        %v380 = vunpack.c.l.b16 %v314
        %v381 = vunpack.c.l.b16 %v315
        %v382 = vunpack.c.l.b16 %v316
        %v383 = vunpack.c.l.b16 %v317
        %v384 = vunpack.c.l.b16 %v318
        %v385 = vunpack.c.l.b16 %v319
        %v386 = vunpack.c.l.b16 %v320
        %v387 = vunpack.c.l.b16 %v321
        %v388 = vunpack.c.l.b16 %v322
        %v389 = vunpack.c.l.b16 %v323
        %v390 = vunpack.c.l.b16 %v324
        %v391 = vpack.c.b16 %v376, %v375
        %v392 = vpack.c.b16 %v378, %v377
        %v393 = vpack.c.b16 %v380, %v379
        %v394 = vpack.c.b16 %v382, %v381
        %v395 = vpack.c.b16 %v384, %v383
        %v396 = vpack.c.b16 %v386, %v385
        %v397 = vpack.c.b16 %v388, %v387
        %v398 = vpack.c.b16 %v390, %v389
        %v400 = vshrl.u32 %v391, 16
        %v402 = vshll.u32 %v391, 16
        %v404 = vrot.slane %v402, 1
        %v405 = vor.u32 %v400, %v404
        %v407 = vshrl.u32 %v392, 16
        %v409 = vshll.u32 %v392, 16
        %v411 = vrot.slane %v409, 1
        %v412 = vor.u32 %v407, %v411
        %v414 = vshrl.u32 %v393, 16
        %v416 = vshll.u32 %v393, 16
        %v418 = vrot.slane %v416, 1
        %v419 = vor.u32 %v414, %v418
        %v421 = vshrl.u32 %v394, 16
        %v423 = vshll.u32 %v394, 16
        %v425 = vrot.slane %v423, 1
        %v426 = vor.u32 %v421, %v425
        %v428 = vshrl.u32 %v395, 16
        %v430 = vshll.u32 %v395, 16
        %v432 = vrot.slane %v430, 1
        %v433 = vor.u32 %v428, %v432
        %v435 = vshrl.u32 %v396, 16
        %v437 = vshll.u32 %v396, 16
        %v439 = vrot.slane %v437, 1
        %v440 = vor.u32 %v435, %v439
        %v442 = vshrl.u32 %v397, 16
        %v444 = vshll.u32 %v397, 16
        %v446 = vrot.slane %v444, 1
        %v447 = vor.u32 %v442, %v446
        %v449 = vshrl.u32 %v398, 16
        %v451 = vshll.u32 %v398, 16
        %v453 = vrot.slane %v451, 1
        %v454 = vor.u32 %v449, %v453
        %v455 = vunpack.c.l.b16 %v405
        %v456 = vunpack.c.l.b16 %v412
        %v457 = vunpack.c.l.b16 %v419
        %v458 = vunpack.c.l.b16 %v426
        %v459 = vunpack.c.l.b16 %v433
        %v460 = vunpack.c.l.b16 %v440
        %v461 = vunpack.c.l.b16 %v447
        %v462 = vunpack.c.l.b16 %v454
        %v463 = vld [vmem:[%s2] sm:$0xf]
        %v464 = vld [vmem:[%s2 + $0x4] sm:$0xf]
        %v465 = vld [vmem:[%s2 + $0x8] sm:$0xf]
        %v466 = vld [vmem:[%s2 + $0xc] sm:$0xf]
        %v467 = vld [vmem:[%s2 + $0x10] sm:$0xf]
        %v468 = vld [vmem:[%s2 + $0x14] sm:$0xf]
        %v469 = vld [vmem:[%s2 + $0x18] sm:$0xf]
        %v470 = vld [vmem:[%s2 + $0x1c] sm:$0xf]
        %v471 = vld [vmem:[%s2 + $0x20] sm:$0xf]
        %v472 = vld [vmem:[%s2 + $0x24] sm:$0xf]
        %v473 = vld [vmem:[%s2 + $0x28] sm:$0xf]
        %v474 = vld [vmem:[%s2 + $0x2c] sm:$0xf]
        %v475 = vld [vmem:[%s2 + $0x30] sm:$0xf]
        %v476 = vld [vmem:[%s2 + $0x34] sm:$0xf]
        %v477 = vld [vmem:[%s2 + $0x38] sm:$0xf]
        %v478 = vld [vmem:[%s2 + $0x3c] sm:$0xf]
        %v479 = vld [vmem:[%s2 + $0x40] sm:$0xf]
        %v480 = vld [vmem:[%s2 + $0x44] sm:$0xf]
        %v481 = vld [vmem:[%s2 + $0x48] sm:$0xf]
        %v482 = vld [vmem:[%s2 + $0x4c] sm:$0xf]
        %v483 = vld [vmem:[%s2 + $0x50] sm:$0xf]
        %v484 = vld [vmem:[%s2 + $0x54] sm:$0xf]
        %v485 = vld [vmem:[%s2 + $0x58] sm:$0xf]
        %v486 = vld [vmem:[%s2 + $0x5c] sm:$0xf]
        %v487 = vld [vmem:[%s2 + $0x60] sm:$0xf]
        %v488 = vld [vmem:[%s2 + $0x64] sm:$0xf]
        %v489 = vld [vmem:[%s2 + $0x68] sm:$0xf]
        %v490 = vld [vmem:[%s2 + $0x6c] sm:$0xf]
        %v491 = vld [vmem:[%s2 + $0x70] sm:$0xf]
        %v492 = vld [vmem:[%s2 + $0x74] sm:$0xf]
        %v493 = vld [vmem:[%s2 + $0x78] sm:$0xf]
        %v494 = vld [vmem:[%s2 + $0x7c] sm:$0xf]
        %v511 = vunpack.c.l.b16 %v326
        %v512 = vunpack.c.l.b16 %v327
        %v513 = vunpack.c.l.b16 %v328
        %v514 = vunpack.c.l.b16 %v329
        %v515 = vunpack.c.l.b16 %v330
        %v516 = vunpack.c.l.b16 %v331
        %v517 = vunpack.c.l.b16 %v332
        %v518 = vunpack.c.l.b16 %v333
        %v519 = vunpack.c.l.b16 %v334
        %v520 = vunpack.c.l.b16 %v335
        %v521 = vunpack.c.l.b16 %v336
        %v522 = vunpack.c.l.b16 %v337
        %v523 = vunpack.c.l.b16 %v338
        %v524 = vunpack.c.l.b16 %v339
        %v525 = vunpack.c.l.b16 %v340
        %v526 = vunpack.c.l.b16 %v341
        %v527 = vpack.c.b16 %v512, %v511
        %v528 = vpack.c.b16 %v514, %v513
        %v529 = vpack.c.b16 %v516, %v515
        %v530 = vpack.c.b16 %v518, %v517
        %v531 = vpack.c.b16 %v520, %v519
        %v532 = vpack.c.b16 %v522, %v521
        %v533 = vpack.c.b16 %v524, %v523
        %v534 = vpack.c.b16 %v526, %v525
        %v536 = vshrl.u32 %v527, 16
        %v538 = vshll.u32 %v527, 16
        %v540 = vrot.slane %v538, 1
        %v541 = vor.u32 %v536, %v540
        %v543 = vshrl.u32 %v528, 16
        %v545 = vshll.u32 %v528, 16
        %v547 = vrot.slane %v545, 1
        %v548 = vor.u32 %v543, %v547
        %v550 = vshrl.u32 %v529, 16
        %v552 = vshll.u32 %v529, 16
        %v554 = vrot.slane %v552, 1
        %v555 = vor.u32 %v550, %v554
        %v557 = vshrl.u32 %v530, 16
        %v559 = vshll.u32 %v530, 16
        %v561 = vrot.slane %v559, 1
        %v562 = vor.u32 %v557, %v561
        %v564 = vshrl.u32 %v531, 16
        %v566 = vshll.u32 %v531, 16
        %v568 = vrot.slane %v566, 1
        %v569 = vor.u32 %v564, %v568
        %v571 = vshrl.u32 %v532, 16
        %v573 = vshll.u32 %v532, 16
        %v575 = vrot.slane %v573, 1
        %v576 = vor.u32 %v571, %v575
        %v578 = vshrl.u32 %v533, 16
        %v580 = vshll.u32 %v533, 16
        %v582 = vrot.slane %v580, 1
        %v583 = vor.u32 %v578, %v582
        %v585 = vshrl.u32 %v534, 16
        %v587 = vshll.u32 %v534, 16
        %v589 = vrot.slane %v587, 1
        %v590 = vor.u32 %v585, %v589
        %v591 = vunpack.c.l.b16 %v541
        %v592 = vunpack.c.l.b16 %v548
        %v593 = vunpack.c.l.b16 %v555
        %v594 = vunpack.c.l.b16 %v562
        %v595 = vunpack.c.l.b16 %v569
        %v596 = vunpack.c.l.b16 %v576
        %v597 = vunpack.c.l.b16 %v583
        %v598 = vunpack.c.l.b16 %v590
        %s599 = scalar_lea.vmem %s2, 128
        %v600 = vld [vmem:[%s599] sm:$0xf]
        %v601 = vld [vmem:[%s599 + $0x4] sm:$0xf]
        %v602 = vld [vmem:[%s599 + $0x8] sm:$0xf]
        %v603 = vld [vmem:[%s599 + $0xc] sm:$0xf]
        %v604 = vld [vmem:[%s599 + $0x10] sm:$0xf]
        %v605 = vld [vmem:[%s599 + $0x14] sm:$0xf]
        %v606 = vld [vmem:[%s599 + $0x18] sm:$0xf]
        %v607 = vld [vmem:[%s599 + $0x1c] sm:$0xf]
        %v608 = vld [vmem:[%s599 + $0x20] sm:$0xf]
        %v609 = vld [vmem:[%s599 + $0x24] sm:$0xf]
        %v610 = vld [vmem:[%s599 + $0x28] sm:$0xf]
        %v611 = vld [vmem:[%s599 + $0x2c] sm:$0xf]
        %v612 = vld [vmem:[%s599 + $0x30] sm:$0xf]
        %v613 = vld [vmem:[%s599 + $0x34] sm:$0xf]
        %v614 = vld [vmem:[%s599 + $0x38] sm:$0xf]
        %v615 = vld [vmem:[%s599 + $0x3c] sm:$0xf]
        %v616 = vld [vmem:[%s599 + $0x40] sm:$0xf]
        %v617 = vld [vmem:[%s599 + $0x44] sm:$0xf]
        %v618 = vld [vmem:[%s599 + $0x48] sm:$0xf]
        %v619 = vld [vmem:[%s599 + $0x4c] sm:$0xf]
        %v620 = vld [vmem:[%s599 + $0x50] sm:$0xf]
        %v621 = vld [vmem:[%s599 + $0x54] sm:$0xf]
        %v622 = vld [vmem:[%s599 + $0x58] sm:$0xf]
        %v623 = vld [vmem:[%s599 + $0x5c] sm:$0xf]
        %v624 = vld [vmem:[%s599 + $0x60] sm:$0xf]
        %v625 = vld [vmem:[%s599 + $0x64] sm:$0xf]
        %v626 = vld [vmem:[%s599 + $0x68] sm:$0xf]
        %v627 = vld [vmem:[%s599 + $0x6c] sm:$0xf]
        %v628 = vld [vmem:[%s599 + $0x70] sm:$0xf]
        %v629 = vld [vmem:[%s599 + $0x74] sm:$0xf]
        %v630 = vld [vmem:[%s599 + $0x78] sm:$0xf]
        %v631 = vld [vmem:[%s599 + $0x7c] sm:$0xf]
        %v632 = vpack.c.b16 %v513, %v511
        %v633 = vpack.c.b16 %v592, %v591
        %v634 = vpack.c.b16 %v517, %v515
        %v635 = vpack.c.b16 %v594, %v593
        %v636 = vpack.c.b16 %v521, %v519
        %v637 = vpack.c.b16 %v596, %v595
        %v638 = vpack.c.b16 %v525, %v523
        %v639 = vpack.c.b16 %v598, %v597
        %v680 = vunpack.c.l.b16 %v600
        %v681 = vunpack.c.l.b16 %v601
        %v682 = vunpack.c.l.b16 %v602
        %v683 = vunpack.c.l.b16 %v603
        %v684 = vunpack.c.l.b16 %v604
        %v685 = vunpack.c.l.b16 %v605
        %v686 = vunpack.c.l.b16 %v606
        %v687 = vunpack.c.l.b16 %v607
        %v688 = vunpack.c.l.b16 %v608
        %v689 = vunpack.c.l.b16 %v609
        %v690 = vunpack.c.l.b16 %v610
        %v691 = vunpack.c.l.b16 %v611
        %v692 = vunpack.c.l.b16 %v612
        %v693 = vunpack.c.l.b16 %v613
        %v694 = vunpack.c.l.b16 %v614
        %v695 = vunpack.c.l.b16 %v615
        %v696 = vunpack.c.l.b16 %v616
        %v697 = vunpack.c.l.b16 %v617
        %v698 = vunpack.c.l.b16 %v618
        %v699 = vunpack.c.l.b16 %v619
        %v700 = vunpack.c.l.b16 %v620
        %v701 = vunpack.c.l.b16 %v621
        %v702 = vunpack.c.l.b16 %v622
        %v703 = vunpack.c.l.b16 %v623
        %v704 = vunpack.c.l.b16 %v624
        %v705 = vunpack.c.l.b16 %v625
        %v706 = vunpack.c.l.b16 %v626
        %v707 = vunpack.c.l.b16 %v627
        %v708 = vunpack.c.l.b16 %v628
        %v709 = vunpack.c.l.b16 %v629
        %v710 = vunpack.c.l.b16 %v630
        %v711 = vunpack.c.l.b16 %v631
        %v712 = vpack.c.b16 %v681, %v680
        %v713 = vpack.c.b16 %v683, %v682
        %v714 = vpack.c.b16 %v685, %v684
        %v715 = vpack.c.b16 %v687, %v686
        %v716 = vpack.c.b16 %v689, %v688
        %v717 = vpack.c.b16 %v691, %v690
        %v718 = vpack.c.b16 %v693, %v692
        %v719 = vpack.c.b16 %v695, %v694
        %v720 = vpack.c.b16 %v697, %v696
        %v721 = vpack.c.b16 %v699, %v698
        %v722 = vpack.c.b16 %v701, %v700
        %v723 = vpack.c.b16 %v703, %v702
        %v724 = vpack.c.b16 %v705, %v704
        %v725 = vpack.c.b16 %v707, %v706
        %v726 = vpack.c.b16 %v709, %v708
        %v727 = vpack.c.b16 %v711, %v710
        %744 = vmatprep.subr.bf16.mxu0 0
        %745 = vmatpush1.bf16.msra.mxu0 %v712
        %746 = vmatprep.subr.bf16.mxu0 0
        %747 = vmatpush1.bf16.msra.mxu0 %v713
        %748 = vmatprep.subr.bf16.mxu0 0
        %749 = vmatpush1.bf16.msra.mxu0 %v714
        %750 = vmatprep.subr.bf16.mxu0 0
        %751 = vmatpush1.bf16.msra.mxu0 %v715
        %752 = vmatprep.subr.bf16.mxu0 0
        %753 = vmatpush1.bf16.msra.mxu0 %v716
        %754 = vmatprep.subr.bf16.mxu0 0
        %755 = vmatpush1.bf16.msra.mxu0 %v717
        %756 = vmatprep.subr.bf16.mxu0 0
        %757 = vmatpush1.bf16.msra.mxu0 %v718
        %758 = vmatprep.subr.bf16.mxu0 0
        %759 = vmatpush1.bf16.msra.mxu0 %v719
        %760 = vmatprep.subr.bf16.mxu0 0
        %761 = vmatpush1.bf16.msra.mxu0 %v720
        %762 = vmatprep.subr.bf16.mxu0 0
        %763 = vmatpush1.bf16.msra.mxu0 %v721
        %764 = vmatprep.subr.bf16.mxu0 0
        %765 = vmatpush1.bf16.msra.mxu0 %v722
        %766 = vmatprep.subr.bf16.mxu0 0
        %767 = vmatpush1.bf16.msra.mxu0 %v723
        %768 = vmatprep.subr.bf16.mxu0 0
        %769 = vmatpush1.bf16.msra.mxu0 %v724
        %770 = vmatprep.subr.bf16.mxu0 0
        %771 = vmatpush1.bf16.msra.mxu0 %v725
        %772 = vmatprep.subr.bf16.mxu0 0
        %773 = vmatpush1.bf16.msra.mxu0 %v726
        %774 = vmatprep.subr.bf16.mxu0 0
        %775 = vmatpush1.bf16.msra.mxu0 %v727
        %776 = vmatprep.mubr.bf16.mxu0 %v633
        %777 = vmatmul.mubr.bf16.gmra.mrb[0].mxu0 %v632
        %v778 = vpop.f32.mrb[0].mxu0
        %v779 = vadd.f32 0.0, %v778
        %v780 = vpop.f32.mrb[0].mxu0
        %v781 = vpop.f32.mrb[0].mxu0
        %v782 = vadd.f32 0.0, %v781
        %v783 = vpop.f32.mrb[0].mxu0
        %784 = vmatprep.mubr.bf16.mxu0 %v635
        %785 = vmatmul.mubr.bf16.gmra.mrb[0].mxu0 %v634
        %v786 = vpop.f32.mrb[0].mxu0
        %v787 = vadd.f32 0.0, %v786
        %v788 = vpop.f32.mrb[0].mxu0
        %v789 = vpop.f32.mrb[0].mxu0
        %v790 = vadd.f32 0.0, %v789
        %v791 = vpop.f32.mrb[0].mxu0
        %792 = vmatprep.mubr.bf16.mxu0 %v637
        %793 = vmatmul.mubr.bf16.gmra.mrb[0].mxu0 %v636
        %v794 = vpop.f32.mrb[0].mxu0
        %v795 = vadd.f32 0.0, %v794
        %v796 = vpop.f32.mrb[0].mxu0
        %v797 = vpop.f32.mrb[0].mxu0
        %v798 = vadd.f32 0.0, %v797
        %v799 = vpop.f32.mrb[0].mxu0
        %800 = vmatprep.mubr.bf16.mxu0 %v639
        %801 = vmatmul.mubr.bf16.gmra.mrb[0].mxu0 %v638
        %v802 = vpop.f32.mrb[0].mxu0
        %v803 = vadd.f32 0.0, %v802
        %v804 = vpop.f32.mrb[0].mxu0
        %v805 = vpop.f32.mrb[0].mxu0
        %v806 = vadd.f32 0.0, %v805
        %v807 = vpop.f32.mrb[0].mxu0
        %808 = vdwg.mxu0
        %v809 = vpack.c.b16 %v377, %v375
        %v810 = vpack.c.b16 %v456, %v455
        %v811 = vpack.c.b16 %v381, %v379
        %v812 = vpack.c.b16 %v458, %v457
        %v813 = vpack.c.b16 %v385, %v383
        %v814 = vpack.c.b16 %v460, %v459
        %v815 = vpack.c.b16 %v389, %v387
        %v816 = vpack.c.b16 %v462, %v461
        %v857 = vunpack.c.l.b16 %v463
        %v858 = vunpack.c.l.b16 %v464
        %v859 = vunpack.c.l.b16 %v465
        %v860 = vunpack.c.l.b16 %v466
        %v861 = vunpack.c.l.b16 %v467
        %v862 = vunpack.c.l.b16 %v468
        %v863 = vunpack.c.l.b16 %v469
        %v864 = vunpack.c.l.b16 %v470
        %v865 = vunpack.c.l.b16 %v471
        %v866 = vunpack.c.l.b16 %v472
        %v867 = vunpack.c.l.b16 %v473
        %v868 = vunpack.c.l.b16 %v474
        %v869 = vunpack.c.l.b16 %v475
        %v870 = vunpack.c.l.b16 %v476
        %v871 = vunpack.c.l.b16 %v477
        %v872 = vunpack.c.l.b16 %v478
        %v873 = vunpack.c.l.b16 %v479
        %v874 = vunpack.c.l.b16 %v480
        %v875 = vunpack.c.l.b16 %v481
        %v876 = vunpack.c.l.b16 %v482
        %v877 = vunpack.c.l.b16 %v483
        %v878 = vunpack.c.l.b16 %v484
        %v879 = vunpack.c.l.b16 %v485
        %v880 = vunpack.c.l.b16 %v486
        %v881 = vunpack.c.l.b16 %v487
        %v882 = vunpack.c.l.b16 %v488
        %v883 = vunpack.c.l.b16 %v489
        %v884 = vunpack.c.l.b16 %v490
        %v885 = vunpack.c.l.b16 %v491
        %v886 = vunpack.c.l.b16 %v492
        %v887 = vunpack.c.l.b16 %v493
        %v888 = vunpack.c.l.b16 %v494
        %v889 = vpack.c.b16 %v858, %v857
        %v890 = vpack.c.b16 %v860, %v859
        %v891 = vpack.c.b16 %v862, %v861
        %v892 = vpack.c.b16 %v864, %v863
        %v893 = vpack.c.b16 %v866, %v865
        %v894 = vpack.c.b16 %v868, %v867
        %v895 = vpack.c.b16 %v870, %v869
        %v896 = vpack.c.b16 %v872, %v871
        %v897 = vpack.c.b16 %v874, %v873
        %v898 = vpack.c.b16 %v876, %v875
        %v899 = vpack.c.b16 %v878, %v877
        %v900 = vpack.c.b16 %v880, %v879
        %v901 = vpack.c.b16 %v882, %v881
        %v902 = vpack.c.b16 %v884, %v883
        %v903 = vpack.c.b16 %v886, %v885
        %v904 = vpack.c.b16 %v888, %v887
        %921 = vmatprep.subr.bf16.mxu0 0
        %922 = vmatpush1.bf16.msra.mxu0 %v889
        %923 = vmatprep.subr.bf16.mxu0 0
        %924 = vmatpush1.bf16.msra.mxu0 %v890
        %925 = vmatprep.subr.bf16.mxu0 0
        %926 = vmatpush1.bf16.msra.mxu0 %v891
        %927 = vmatprep.subr.bf16.mxu0 0
        %928 = vmatpush1.bf16.msra.mxu0 %v892
        %929 = vmatprep.subr.bf16.mxu0 0
        %930 = vmatpush1.bf16.msra.mxu0 %v893
        %931 = vmatprep.subr.bf16.mxu0 0
        %932 = vmatpush1.bf16.msra.mxu0 %v894
        %933 = vmatprep.subr.bf16.mxu0 0
        %934 = vmatpush1.bf16.msra.mxu0 %v895
        %935 = vmatprep.subr.bf16.mxu0 0
        %936 = vmatpush1.bf16.msra.mxu0 %v896
        %937 = vmatprep.subr.bf16.mxu0 0
        %938 = vmatpush1.bf16.msra.mxu0 %v897
        %939 = vmatprep.subr.bf16.mxu0 0
        %940 = vmatpush1.bf16.msra.mxu0 %v898
        %941 = vmatprep.subr.bf16.mxu0 0
        %942 = vmatpush1.bf16.msra.mxu0 %v899
        %943 = vmatprep.subr.bf16.mxu0 0
        %944 = vmatpush1.bf16.msra.mxu0 %v900
        %945 = vmatprep.subr.bf16.mxu0 0
        %946 = vmatpush1.bf16.msra.mxu0 %v901
        %947 = vmatprep.subr.bf16.mxu0 0
        %948 = vmatpush1.bf16.msra.mxu0 %v902
        %949 = vmatprep.subr.bf16.mxu0 0
        %950 = vmatpush1.bf16.msra.mxu0 %v903
        %951 = vmatprep.subr.bf16.mxu0 0
        %952 = vmatpush1.bf16.msra.mxu0 %v904
        %953 = vmatprep.mubr.bf16.mxu0 %v810
        %954 = vmatmul.mubr.bf16.gmra.mrb[0].mxu0 %v809
        %v955 = vpop.f32.mrb[0].mxu0
        %v956 = vadd.f32 %v779, %v955
        %v957 = vpop.f32.mrb[0].mxu0
        %v958 = vpop.f32.mrb[0].mxu0
        %v959 = vadd.f32 %v782, %v958
        %v960 = vpop.f32.mrb[0].mxu0
        %961 = vmatprep.mubr.bf16.mxu0 %v812
        %962 = vmatmul.mubr.bf16.gmra.mrb[0].mxu0 %v811
        %v963 = vpop.f32.mrb[0].mxu0
        %v964 = vadd.f32 %v787, %v963
        %v965 = vpop.f32.mrb[0].mxu0
        %v966 = vpop.f32.mrb[0].mxu0
        %v967 = vadd.f32 %v790, %v966
        %v968 = vpop.f32.mrb[0].mxu0
        %969 = vmatprep.mubr.bf16.mxu0 %v814
        %970 = vmatmul.mubr.bf16.gmra.mrb[0].mxu0 %v813
        %v971 = vpop.f32.mrb[0].mxu0
        %v972 = vadd.f32 %v795, %v971
        %v973 = vpop.f32.mrb[0].mxu0
        %v974 = vpop.f32.mrb[0].mxu0
        %v975 = vadd.f32 %v798, %v974
        %v976 = vpop.f32.mrb[0].mxu0
        %977 = vmatprep.mubr.bf16.mxu0 %v816
        %978 = vmatmul.mubr.bf16.gmra.mrb[0].mxu0 %v815
        %v979 = vpop.f32.mrb[0].mxu0
        %v980 = vadd.f32 %v803, %v979
        %v981 = vpop.f32.mrb[0].mxu0
        %v982 = vpop.f32.mrb[0].mxu0
        %v983 = vadd.f32 %v806, %v982
        %v984 = vpop.f32.mrb[0].mxu0
        %985 = vdwg.mxu0
        %v1002 = vunpack.c.l.b16 %v345
        %v1003 = vunpack.c.l.b16 %v346
        %v1004 = vunpack.c.l.b16 %v347
        %v1005 = vunpack.c.l.b16 %v348
        %v1006 = vunpack.c.l.b16 %v349
        %v1007 = vunpack.c.l.b16 %v350
        %v1008 = vunpack.c.l.b16 %v351
        %v1009 = vunpack.c.l.b16 %v352
        %v1010 = vunpack.c.l.b16 %v353
        %v1011 = vunpack.c.l.b16 %v354
        %v1012 = vunpack.c.l.b16 %v355
        %v1013 = vunpack.c.l.b16 %v356
        %v1014 = vunpack.c.l.b16 %v357
        %v1015 = vunpack.c.l.b16 %v358
        %v1016 = vunpack.c.l.b16 %v342
        %v1017 = vunpack.c.l.b16 %v343
        %v1018 = vpack.c.b16 %v1003, %v1002
        %v1019 = vpack.c.b16 %v1005, %v1004
        %v1020 = vpack.c.b16 %v1007, %v1006
        %v1021 = vpack.c.b16 %v1009, %v1008
        %v1022 = vpack.c.b16 %v1011, %v1010
        %v1023 = vpack.c.b16 %v1013, %v1012
        %v1024 = vpack.c.b16 %v1015, %v1014
        %v1025 = vpack.c.b16 %v1017, %v1016
        %v1027 = vshrl.u32 %v1018, 16
        %v1029 = vshll.u32 %v1018, 16
        %v1031 = vrot.slane %v1029, 1
        %v1032 = vor.u32 %v1027, %v1031
        %v1034 = vshrl.u32 %v1019, 16
        %v1036 = vshll.u32 %v1019, 16
        %v1038 = vrot.slane %v1036, 1
        %v1039 = vor.u32 %v1034, %v1038
        %v1041 = vshrl.u32 %v1020, 16
        %v1043 = vshll.u32 %v1020, 16
        %v1045 = vrot.slane %v1043, 1
        %v1046 = vor.u32 %v1041, %v1045
        %v1048 = vshrl.u32 %v1021, 16
        %v1050 = vshll.u32 %v1021, 16
        %v1052 = vrot.slane %v1050, 1
        %v1053 = vor.u32 %v1048, %v1052
        %v1055 = vshrl.u32 %v1022, 16
        %v1057 = vshll.u32 %v1022, 16
        %v1059 = vrot.slane %v1057, 1
        %v1060 = vor.u32 %v1055, %v1059
        %v1062 = vshrl.u32 %v1023, 16
        %v1064 = vshll.u32 %v1023, 16
        %v1066 = vrot.slane %v1064, 1
        %v1067 = vor.u32 %v1062, %v1066
        %v1069 = vshrl.u32 %v1024, 16
        %v1071 = vshll.u32 %v1024, 16
        %v1073 = vrot.slane %v1071, 1
        %v1074 = vor.u32 %v1069, %v1073
        %v1076 = vshrl.u32 %v1025, 16
        %v1078 = vshll.u32 %v1025, 16
        %v1080 = vrot.slane %v1078, 1
        %v1081 = vor.u32 %v1076, %v1080
        %v1082 = vunpack.c.l.b16 %v1032
        %v1083 = vunpack.c.l.b16 %v1039
        %v1084 = vunpack.c.l.b16 %v1046
        %v1085 = vunpack.c.l.b16 %v1053
        %v1086 = vunpack.c.l.b16 %v1060
        %v1087 = vunpack.c.l.b16 %v1067
        %v1088 = vunpack.c.l.b16 %v1074
        %v1089 = vunpack.c.l.b16 %v1081
        %s1090 = scalar_lea.vmem %s2, 256
        %v1091 = vld [vmem:[%s1090] sm:$0xf]
        %v1092 = vld [vmem:[%s1090 + $0x4] sm:$0xf]
        %v1093 = vld [vmem:[%s1090 + $0x8] sm:$0xf]
        %v1094 = vld [vmem:[%s1090 + $0xc] sm:$0xf]
        %v1095 = vld [vmem:[%s1090 + $0x10] sm:$0xf]
        %v1096 = vld [vmem:[%s1090 + $0x14] sm:$0xf]
        %v1097 = vld [vmem:[%s1090 + $0x18] sm:$0xf]
        %v1098 = vld [vmem:[%s1090 + $0x1c] sm:$0xf]
        %v1099 = vld [vmem:[%s1090 + $0x20] sm:$0xf]
        %v1100 = vld [vmem:[%s1090 + $0x24] sm:$0xf]
        %v1101 = vld [vmem:[%s1090 + $0x28] sm:$0xf]
        %v1102 = vld [vmem:[%s1090 + $0x2c] sm:$0xf]
        %v1103 = vld [vmem:[%s1090 + $0x30] sm:$0xf]
        %v1104 = vld [vmem:[%s1090 + $0x34] sm:$0xf]
        %v1105 = vld [vmem:[%s1090 + $0x38] sm:$0xf]
        %v1106 = vld [vmem:[%s1090 + $0x3c] sm:$0xf]
        %v1107 = vld [vmem:[%s1090 + $0x40] sm:$0xf]
        %v1108 = vld [vmem:[%s1090 + $0x44] sm:$0xf]
        %v1109 = vld [vmem:[%s1090 + $0x48] sm:$0xf]
        %v1110 = vld [vmem:[%s1090 + $0x4c] sm:$0xf]
        %v1111 = vld [vmem:[%s1090 + $0x50] sm:$0xf]
        %v1112 = vld [vmem:[%s1090 + $0x54] sm:$0xf]
        %v1113 = vld [vmem:[%s1090 + $0x58] sm:$0xf]
        %v1114 = vld [vmem:[%s1090 + $0x5c] sm:$0xf]
        %v1115 = vld [vmem:[%s1090 + $0x60] sm:$0xf]
        %v1116 = vld [vmem:[%s1090 + $0x64] sm:$0xf]
        %v1117 = vld [vmem:[%s1090 + $0x68] sm:$0xf]
        %v1118 = vld [vmem:[%s1090 + $0x6c] sm:$0xf]
        %v1119 = vld [vmem:[%s1090 + $0x70] sm:$0xf]
        %v1120 = vld [vmem:[%s1090 + $0x74] sm:$0xf]
        %v1121 = vld [vmem:[%s1090 + $0x78] sm:$0xf]
        %v1122 = vld [vmem:[%s1090 + $0x7c] sm:$0xf]
        %v1123 = vpack.c.b16 %v1004, %v1002
        %v1124 = vpack.c.b16 %v1083, %v1082
        %v1125 = vpack.c.b16 %v1008, %v1006
        %v1126 = vpack.c.b16 %v1085, %v1084
        %v1127 = vpack.c.b16 %v1012, %v1010
        %v1128 = vpack.c.b16 %v1087, %v1086
        %v1129 = vpack.c.b16 %v1016, %v1014
        %v1130 = vpack.c.b16 %v1089, %v1088
        %v1171 = vunpack.c.l.b16 %v1091
        %v1172 = vunpack.c.l.b16 %v1092
        %v1173 = vunpack.c.l.b16 %v1093
        %v1174 = vunpack.c.l.b16 %v1094
        %v1175 = vunpack.c.l.b16 %v1095
        %v1176 = vunpack.c.l.b16 %v1096
        %v1177 = vunpack.c.l.b16 %v1097
        %v1178 = vunpack.c.l.b16 %v1098
        %v1179 = vunpack.c.l.b16 %v1099
        %v1180 = vunpack.c.l.b16 %v1100
        %v1181 = vunpack.c.l.b16 %v1101
        %v1182 = vunpack.c.l.b16 %v1102
        %v1183 = vunpack.c.l.b16 %v1103
        %v1184 = vunpack.c.l.b16 %v1104
        %v1185 = vunpack.c.l.b16 %v1105
        %v1186 = vunpack.c.l.b16 %v1106
        %v1187 = vunpack.c.l.b16 %v1107
        %v1188 = vunpack.c.l.b16 %v1108
        %v1189 = vunpack.c.l.b16 %v1109
        %v1190 = vunpack.c.l.b16 %v1110
        %v1191 = vunpack.c.l.b16 %v1111
        %v1192 = vunpack.c.l.b16 %v1112
        %v1193 = vunpack.c.l.b16 %v1113
        %v1194 = vunpack.c.l.b16 %v1114
        %v1195 = vunpack.c.l.b16 %v1115
        %v1196 = vunpack.c.l.b16 %v1116
        %v1197 = vunpack.c.l.b16 %v1117
        %v1198 = vunpack.c.l.b16 %v1118
        %v1199 = vunpack.c.l.b16 %v1119
        %v1200 = vunpack.c.l.b16 %v1120
        %v1201 = vunpack.c.l.b16 %v1121
        %v1202 = vunpack.c.l.b16 %v1122
        %v1203 = vpack.c.b16 %v1172, %v1171
        %v1204 = vpack.c.b16 %v1174, %v1173
        %v1205 = vpack.c.b16 %v1176, %v1175
        %v1206 = vpack.c.b16 %v1178, %v1177
        %v1207 = vpack.c.b16 %v1180, %v1179
        %v1208 = vpack.c.b16 %v1182, %v1181
        %v1209 = vpack.c.b16 %v1184, %v1183
        %v1210 = vpack.c.b16 %v1186, %v1185
        %v1211 = vpack.c.b16 %v1188, %v1187
        %v1212 = vpack.c.b16 %v1190, %v1189
        %v1213 = vpack.c.b16 %v1192, %v1191
        %v1214 = vpack.c.b16 %v1194, %v1193
        %v1215 = vpack.c.b16 %v1196, %v1195
        %v1216 = vpack.c.b16 %v1198, %v1197
        %v1217 = vpack.c.b16 %v1200, %v1199
        %v1218 = vpack.c.b16 %v1202, %v1201
        %1235 = vmatprep.subr.bf16.mxu0 0
        %1236 = vmatpush1.bf16.msra.mxu0 %v1203
        %1237 = vmatprep.subr.bf16.mxu0 0
        %1238 = vmatpush1.bf16.msra.mxu0 %v1204
        %1239 = vmatprep.subr.bf16.mxu0 0
        %1240 = vmatpush1.bf16.msra.mxu0 %v1205
        %1241 = vmatprep.subr.bf16.mxu0 0
        %1242 = vmatpush1.bf16.msra.mxu0 %v1206
        %1243 = vmatprep.subr.bf16.mxu0 0
        %1244 = vmatpush1.bf16.msra.mxu0 %v1207
        %1245 = vmatprep.subr.bf16.mxu0 0
        %1246 = vmatpush1.bf16.msra.mxu0 %v1208
        %1247 = vmatprep.subr.bf16.mxu0 0
        %1248 = vmatpush1.bf16.msra.mxu0 %v1209
        %1249 = vmatprep.subr.bf16.mxu0 0
        %1250 = vmatpush1.bf16.msra.mxu0 %v1210
        %1251 = vmatprep.subr.bf16.mxu0 0
        %1252 = vmatpush1.bf16.msra.mxu0 %v1211
        %1253 = vmatprep.subr.bf16.mxu0 0
        %1254 = vmatpush1.bf16.msra.mxu0 %v1212
        %1255 = vmatprep.subr.bf16.mxu0 0
        %1256 = vmatpush1.bf16.msra.mxu0 %v1213
        %1257 = vmatprep.subr.bf16.mxu0 0
        %1258 = vmatpush1.bf16.msra.mxu0 %v1214
        %1259 = vmatprep.subr.bf16.mxu0 0
        %1260 = vmatpush1.bf16.msra.mxu0 %v1215
        %1261 = vmatprep.subr.bf16.mxu0 0
        %1262 = vmatpush1.bf16.msra.mxu0 %v1216
        %1263 = vmatprep.subr.bf16.mxu0 0
        %1264 = vmatpush1.bf16.msra.mxu0 %v1217
        %1265 = vmatprep.subr.bf16.mxu0 0
        %1266 = vmatpush1.bf16.msra.mxu0 %v1218
        %1267 = vmatprep.mubr.bf16.mxu0 %v1124
        %1268 = vmatmul.mubr.bf16.gmra.mrb[0].mxu0 %v1123
        %v1269 = vpop.f32.mrb[0].mxu0
        %v1270 = vadd.f32 0.0, %v1269
        %v1271 = vpop.f32.mrb[0].mxu0
        %v1272 = vpop.f32.mrb[0].mxu0
        %v1273 = vadd.f32 0.0, %v1272
        %v1274 = vpop.f32.mrb[0].mxu0
        %1275 = vmatprep.mubr.bf16.mxu0 %v1126
        %1276 = vmatmul.mubr.bf16.gmra.mrb[0].mxu0 %v1125
        %v1277 = vpop.f32.mrb[0].mxu0
        %v1278 = vadd.f32 0.0, %v1277
        %v1279 = vpop.f32.mrb[0].mxu0
        %v1280 = vpop.f32.mrb[0].mxu0
        %v1281 = vadd.f32 0.0, %v1280
        %v1282 = vpop.f32.mrb[0].mxu0
        %1283 = vmatprep.mubr.bf16.mxu0 %v1128
        %1284 = vmatmul.mubr.bf16.gmra.mrb[0].mxu0 %v1127
        %v1285 = vpop.f32.mrb[0].mxu0
        %v1286 = vadd.f32 0.0, %v1285
        %v1287 = vpop.f32.mrb[0].mxu0
        %v1288 = vpop.f32.mrb[0].mxu0
        %v1289 = vadd.f32 0.0, %v1288
        %v1290 = vpop.f32.mrb[0].mxu0
        %1291 = vmatprep.mubr.bf16.mxu0 %v1130
        %1292 = vmatmul.mubr.bf16.gmra.mrb[0].mxu0 %v1129
        %v1293 = vpop.f32.mrb[0].mxu0
        %v1294 = vadd.f32 0.0, %v1293
        %v1295 = vpop.f32.mrb[0].mxu0
        %v1296 = vpop.f32.mrb[0].mxu0
        %v1297 = vadd.f32 0.0, %v1296
        %v1298 = vpop.f32.mrb[0].mxu0
        %1299 = vdwg.mxu0
        %v1300 = vadd.f32 %v956, %v1270
        %v1301 = vadd.f32 %v959, %v1273
        %v1302 = vadd.f32 %v964, %v1278
        %v1303 = vadd.f32 %v967, %v1281
        %v1304 = vadd.f32 %v972, %v1286
        %v1305 = vadd.f32 %v975, %v1289
        %v1306 = vadd.f32 %v980, %v1294
        %v1307 = vadd.f32 %v983, %v1297
        %v1308 = vld [vmem:[%s3] sm:$0x1]
        %v1310 = vlaneseq
        %v1311 = vshrl.u32 %v1310, 7
        %v1312 = vsub.s32 0, %v1311
        %v1313 = vrot.slane %v1308, %v1312
        %v1315 = vadd.f32 %v1300, %v1313
        %v1316 = vadd.f32 %v1301, %v1313
        %v1317 = vadd.f32 %v1302, %v1313
        %v1318 = vadd.f32 %v1303, %v1313
        %v1319 = vadd.f32 %v1304, %v1313
        %v1320 = vadd.f32 %v1305, %v1313
        %v1321 = vadd.f32 %v1306, %v1313
        %v1322 = vadd.f32 %v1307, %v1313
        %vm1323 = vcmp.ge.f32.partialorder %v1315, 0.0
        %vm1324 = vcmp.ge.f32.partialorder %v1316, 0.0
        %vm1325 = vcmp.ge.f32.partialorder %v1317, 0.0
        %vm1326 = vcmp.ge.f32.partialorder %v1318, 0.0
        %vm1327 = vcmp.ge.f32.partialorder %v1319, 0.0
        %vm1328 = vcmp.ge.f32.partialorder %v1320, 0.0
        %vm1329 = vcmp.ge.f32.partialorder %v1321, 0.0
        %vm1330 = vcmp.ge.f32.partialorder %v1322, 0.0
        %v1331 = vmul.f32 %v1315, 0.01
        %v1332 = vmul.f32 %v1316, 0.01
        %v1333 = vmul.f32 %v1317, 0.01
        %v1334 = vmul.f32 %v1318, 0.01
        %v1335 = vmul.f32 %v1319, 0.01
        %v1336 = vmul.f32 %v1320, 0.01
        %v1337 = vmul.f32 %v1321, 0.01
        %v1338 = vmul.f32 %v1322, 0.01
        %v1339 = vsel %vm1323, %v1315, %v1331
        %v1340 = vsel %vm1324, %v1316, %v1332
        %v1341 = vsel %vm1325, %v1317, %v1333
        %v1342 = vsel %vm1326, %v1318, %v1334
        %v1343 = vsel %vm1327, %v1319, %v1335
        %v1344 = vsel %vm1328, %v1320, %v1336
        %v1345 = vsel %vm1329, %v1321, %v1337
        %v1346 = vsel %vm1330, %v1322, %v1338
        %vm1347 = vcmask 523264
        %1348 = vst.msk [vmem:[%s270] sm:$0xff] %vm1347, %v1339
        %1349 = vst.msk [vmem:[%s270 + $0x8] sm:$0xff] %vm1347, %v1340
        %1350 = vst.msk [vmem:[%s270 + $0x10] sm:$0xff] %vm1347, %v1341
        %1351 = vst.msk [vmem:[%s270 + $0x18] sm:$0xff] %vm1347, %v1342
        %1352 = vst.msk [vmem:[%s270 + $0x20] sm:$0xff] %vm1347, %v1343
        %1353 = vst.msk [vmem:[%s270 + $0x28] sm:$0xff] %vm1347, %v1344
        %1354 = vst.msk [vmem:[%s270 + $0x30] sm:$0xff] %vm1347, %v1345
        %1355 = vst.msk [vmem:[%s270 + $0x38] sm:$0xff] %vm1347, %v1346
        %s1356 = sand.u32 %s142, 1
        %s1357 = scalar_lea.sflag [#allocation3], %s1356
        %s1358 = sand.u32 %s142, 1
        %s1359 = smul.addr %s1358, 64
        %s1360 = scalar_lea.vmem [#allocation2], %s1359
        // Predicated region
        $region37: #{downsampler_forward.1} parent=35 // pred_check
          %p1361 = pneg %p152
        $region38: #{downsampler_forward.1} parent=35 // pred_check_branch
          %1363 = sbr.rel (%p1361) target = $region40
        $region39: #{downsampler_forward.1} parent=35 // pred_region
          %s1364 = smul.u32 8, %s23
          %s1366 = ssub.s32 1024, 1024
          %1367 = vsyncadd %s1357, %s1366
          %s1368 = smul.addr %s22, 8
          %s1369 = sadd.s32 %s1364, %s1368
          %s1370 = smul.addr %s1369, 128
          %s1371 = scalar_lea.hbm %s4, %s1370
          %s1372 = sshll.u32 %s1360, 4
          %s1373 = int_to_ptr.vmem [resolvable:$true] %s1372
          %1378 = dma.vmem_to_hbm [thread:$0]  %s1373, 1024, %s1371, %s1357, 128, 128, 8
        $region40: #{downsampler_forward.1} parent=35 // pred_fallthru
          _
      $region36: #{downsampler_forward.1} parent=5 // pred_fallthru
        _
      %p1379 = scmp.le.s32.totalorder 2, %s13
      // Predicated region
      $region41: #{downsampler_forward.1} parent=5 // pred_check
        %p1380 = pneg %p1379
      $region42: #{downsampler_forward.1} parent=5 // pred_check_branch
        %1382 = sbr.rel (%p1380) target = $region44
      $region43: #{downsampler_forward.1} parent=5 // pred_region
        %s1383 = ssub.s32 %s13, 2
        // Predicated region
        $region45: #{downsampler_forward.1} parent=43 // pred_check
          %p1384 = pneg %p158
        $region46: #{downsampler_forward.1} parent=43 // pred_check_branch
          %1386 = sbr.rel (%p1384) target = $region48
        $region47: #{downsampler_forward.1} parent=43 // pred_region
          %s1387 = sand.u32 %s143, 1
          %s1388 = scalar_lea.sflag [#allocation3], %s1387
          %s1389 = sand.u32 %s143, 1
          %s1390 = smul.addr %s1389, 64
          %s1391 = scalar_lea.vmem [#allocation2], %s1390
          %1392 = dma.done %s1388, 1024
        $region48: #{downsampler_forward.1} parent=43 // pred_fallthru
          _
      $region44: #{downsampler_forward.1} parent=5 // pred_fallthru
        _
    $region6: #{downsampler_forward.1} parent=1 // loop_footer
      %s17 = sadd.s32 1, %s13
    $region7: #{downsampler_forward.1} parent=1 // loop_footer_branch
      %12 = sbr.rel target = $region3
    $region8: #{downsampler_forward.1} parent=1 // loop_exit
      _
    %1393 = vsyncpa [#allocation3], 1
    %s1394 = scalar_lea.sflag [#allocation3], 1
    %1395 = vsyncpa %s1394, 1

</llo_original>
